<compile_context>
chip_gen: v5e
topology: v5e:2x2
jax: 0.10.0
libtpu: 0.0.40
codegen_flags: <defaults>
</compile_context>

<pallas_src>
import math

import jax
import jax.numpy as jnp
from jax.experimental import pallas as pl
from jax.experimental.pallas import tpu as pltpu


def _spatial_dropout_kernel(mask_ref, x_ref, o_ref):
    # mask_ref: (B, H') pre-scaled {0, 1/(1-p)} mask in the input dtype.
    # x_ref / o_ref: (B, TS, H') tile of the input / output.
    mask = mask_ref[...]                          # tiny load, once per grid step
    o_ref[...] = x_ref[...] * mask[:, None, :]    # single broadcast, native dtype


def _choose_seq_tile(B, S, H, itemsize, target_bytes=2 << 20):
    """Largest seq-tile (multiple of 8) whose (B, TS, H) block is ~target_bytes."""
    rows = target_bytes // max(1, B * H * itemsize)
    rows = max(8, (rows // 8) * 8)
    return S if rows >= S else rows


def spatial_dropout(x, drop_prob, key, training=True):
    """JAX wrapper reproducing SpatialDropout.forward.

    x:          (B, S, H) array
    drop_prob:  python float (static)
    key:        jax.random key (or python int seed) for the mask; callers
                should vary it per training step.
    training:   python bool (static)
    """
    if (not training) or drop_prob == 0.0:
        return x
    if drop_prob >= 1.0:
        # noise.fill_(0) -> everything dropped.
        return jnp.zeros_like(x)
    if isinstance(key, int):
        key = jax.random.PRNGKey(key)

    B, S, H = x.shape
    keep_prob = 1.0 - float(drop_prob)

    # (B, H) Bernoulli(keep_prob) mask, pre-scaled by 1/keep_prob (inverted
    # dropout), shared across the sequence axis.  Kept in x.dtype so the
    # kernel multiplies in the native dtype.
    mask = jax.random.bernoulli(key, keep_prob, (B, H)).astype(x.dtype)
    mask = mask * jnp.asarray(1.0 / keep_prob, dtype=x.dtype)

    # Lane-dense store trick: if H is not a multiple of 128, fold `fold`
    # consecutive seq positions into the lane axis so the stored tile's last
    # dim is a multiple of 128.  Semantics are unchanged because the tiled
    # mask repeats the same (B, H) values for each folded position.
    fold = 1
    if H % 128 != 0:
        f = math.lcm(H, 128) // H
        if f <= S and S % f == 0:
            fold = f
    if fold > 1:
        xk = x.reshape(B, S // fold, fold * H)
        maskk = jnp.tile(mask, (1, fold))
    else:
        xk, maskk = x, mask
    Bk, Sk, Hk = xk.shape

    ts = _choose_seq_tile(Bk, Sk, Hk, xk.dtype.itemsize)
    grid = (pl.cdiv(Sk, ts),)

    tile_bytes = Bk * ts * Hk * xk.dtype.itemsize
    mask_bytes = Bk * Hk * xk.dtype.itemsize
    # Double-buffered input + output tiles + mask + slack; capped well below
    # v7x's 64 MiB physical VMEM, floored at the v5e default scoped limit.
    vmem_limit = min(max(4 * tile_bytes + 4 * mask_bytes + (2 << 20), 16 << 20), 48 << 20)

    out = pl.pallas_call(
        _spatial_dropout_kernel,
        out_shape=jax.ShapeDtypeStruct((Bk, Sk, Hk), xk.dtype),
        grid_spec=pltpu.PrefetchScalarGridSpec(
            num_scalar_prefetch=0,
            grid=grid,
            in_specs=[
                pl.BlockSpec((Bk, Hk), lambda i: (0, 0)),         # mask: same block every step
                pl.BlockSpec((Bk, ts, Hk), lambda i: (0, i, 0)),  # x: streamed over seq
            ],
            out_specs=pl.BlockSpec((Bk, ts, Hk), lambda i: (0, i, 0)),
        ),
        compiler_params=pltpu.CompilerParams(
            dimension_semantics=("parallel",),   # no cross-step state -> v7x megacore OK
            vmem_limit_bytes=int(vmem_limit),
        ),
    )(maskk, xk)

    if fold > 1:
        out = out.reshape(B, S, H)
    return out


if __name__ == "__main__":
    key = jax.random.PRNGKey(0)
    B, S, H = 2, 8, 32
    x = jax.random.normal(key, (B, S, H), dtype=jnp.float32)

    drop_prob = 0.3
    mask_key = jax.random.PRNGKey(42)
    out = spatial_dropout(x, drop_prob, mask_key, training=True)
    out = jax.block_until_ready(out)

    # Sanity checks on semantics (mask shared across seq axis, correct scale).
    keep_scale = 1.0 / (1.0 - drop_prob)
    ratio = jnp.where(jnp.abs(x) > 1e-6, out / x, 0.0)
    # For each (b, h): ratio must be identical across all seq positions.
    same_across_seq = jnp.allclose(ratio, ratio[:, :1, :], atol=1e-5)
    # Ratio values must be either 0 or 1/(1-p).
    valid_values = jnp.all(
        (jnp.abs(ratio) < 1e-5) | (jnp.abs(ratio - keep_scale) < 1e-4)
    )
    # Eval mode / p==0 -> identity; p==1 -> zeros.
    identity_ok = jnp.array_equal(
        spatial_dropout(x, drop_prob, mask_key, training=False), x)
    zeros_ok = jnp.array_equal(
        spatial_dropout(x, 1.0, mask_key, training=True), jnp.zeros_like(x))

    assert bool(same_across_seq), "mask not shared across sequence axis"
    assert bool(valid_values), "mask values not in {0, 1/(1-p)}"
    assert bool(identity_ok), "eval-mode identity failed"
    assert bool(zeros_ok), "p==1 zeroing failed"

    print("KERNEL_OK")
</pallas_src>

<mosaic_0001>
module attributes {stable_mosaic.version = 11 : i64} {
  func.func @_spatial_dropout_kernel(%arg0: i32, %arg1: memref<2x128xf32, #tpu.memory_space<vmem>>, %arg2: memref<2x2x128xf32, #tpu.memory_space<vmem>>, %arg3: memref<2x2x128xf32, #tpu.memory_space<vmem>>) attributes {dimension_semantics = [#tpu.dimension_semantics<parallel>], iteration_bounds = array<i64: 1>, scalar_prefetch = 0 : i64, scratch_operands = 0 : i64, tpu.core_type = #tpu.core_type<tc>, window_params = [{pipeline_mode = #tpu.pipeline_mode<synchronous>, transform_indices = @transform_0, window_bounds = array<i64: 2, 128>}, {transform_indices = @transform_1, window_bounds = array<i64: 2, 2, 128>}, {transform_indices = @transform_2, window_bounds = array<i64: 2, 2, 128>}]} {
    %c0 = arith.constant 0 : index
    %c0_0 = arith.constant 0 : index
    %0 = vector.load %arg1[%c0, %c0_0] : memref<2x128xf32, #tpu.memory_space<vmem>>, vector<2x128xf32>
    %c0_1 = arith.constant 0 : index
    %c0_2 = arith.constant 0 : index
    %c0_3 = arith.constant 0 : index
    %1 = vector.load %arg2[%c0_1, %c0_2, %c0_3] : memref<2x2x128xf32, #tpu.memory_space<vmem>>, vector<2x2x128xf32>
    %2 = vector.shape_cast %0 : vector<2x128xf32> to vector<2x1x128xf32>
    %3 = vector.broadcast %2 : vector<2x1x128xf32> to vector<2x2x128xf32>
    %4 = arith.mulf %1, %3 : vector<2x2x128xf32>
    %c0_4 = arith.constant 0 : index
    %c0_5 = arith.constant 0 : index
    %c0_6 = arith.constant 0 : index
    %5 = vector.load %arg3[%c0_4, %c0_5, %c0_6] : memref<2x2x128xf32, #tpu.memory_space<vmem>>, vector<2x2x128xf32>
    tpu.vector_store %arg3[%c0_4, %c0_5, %c0_6], %4 {strides = array<i32>} : memref<2x2x128xf32, #tpu.memory_space<vmem>>, vector<2x2x128xf32>,
    return
  }
  func.func @transform_0(%arg0: i32) -> (i32, i32) {
    %c0_i32 = arith.constant 0 : i32
    %c0_i32_0 = arith.constant 0 : i32
    %c0_i32_1 = arith.constant 0 : i32
    return %c0_i32, %c0_i32_0 : i32, i32
  }
  func.func @transform_1(%arg0: i32) -> (i32, i32, i32) {
    %c0_i32 = arith.constant 0 : i32
    %c0_i32_0 = arith.constant 0 : i32
    %c0_i32_1 = arith.constant 0 : i32
    return %c0_i32, %arg0, %c0_i32_0 : i32, i32, i32
  }
  func.func @transform_2(%arg0: i32) -> (i32, i32, i32) {
    %c0_i32 = arith.constant 0 : i32
    %c0_i32_0 = arith.constant 0 : i32
    %c0_i32_1 = arith.constant 0 : i32
    return %c0_i32, %arg0, %c0_i32_0 : i32, i32, i32
  }
}

</mosaic_0001>

<llo_original>
// kernel: tpu_custom_call.1
$region0: #{tpu_custom_call.1}
  #allocation0 [shape = 'u32[]', space=smem, size = 0x4, offset = 0x4, fixed_abs, tag = 'smem constant byte address 0x4 - core index']
  #allocation1 [shape = 'u32[72,128]{1,0:T(1,128)}', space=vmem, size = 0x9000, scoped, tag = 'internal scratch']
  %s0 = inlined_call_operand.hbm [shape: f32[2,128], index: 0, kind: input, shape index: {}]
  %s1 = inlined_call_operand.hbm [shape: f32[2,2,128], index: 1, kind: input, shape index: {}]
  %s2 = inlined_call_operand.hbm [shape: f32[2,2,128], index: 2, kind: output, shape index: {}]
  %s3 = sld [smem:[#allocation0]]
  $region26: #{tpu_custom_call.1} parent=0
    _
  %s5 = ssub.s32 1, %s3
  %s6 = scalar_select 0, %s5, %s3
  $region1: #{tpu_custom_call.1} parent=0
    #allocation2 [shape = 'u8[1024]{0}', space=vmem, size = 0x400, scoped, tag = 'input window, operand 0, single buffered']
    #allocation3 [shape = 's32[1]{0}', space=sflag, size = 0x4, scoped, tag = 'scoped memory for tpu_custom_call.1']
    #allocation4 [shape = 's32[1]{0}', space=sflag, size = 0x4, scoped, tag = 'scoped memory for tpu_custom_call.1']
    #allocation5 [shape = 'u8[2048]{0}', space=vmem, size = 0x800, scoped, tag = 'input window, operand 1, single buffered']
    #allocation6 [shape = 's32[1]{0}', space=sflag, size = 0x4, scoped, tag = 'scoped memory for tpu_custom_call.1']
    #allocation7 [shape = 'u8[2048]{0}', space=vmem, size = 0x800, scoped, tag = 'output window, operand 0, single buffered']
    %7 = vsyncpa [#allocation3], 0
    %8 = vsyncpa [#allocation6], 0
    %9 = vsyncpa [#allocation4], 0
    // Predicated region
    $region2: #{tpu_custom_call.1} parent=1 // pred_check
      _
    $region3: #{tpu_custom_call.1} parent=1 // pred_check_branch
      %11 = sbr.rel (0) target = $region5
    $region4: #{tpu_custom_call.1} parent=1 // pred_region
      %13 = vsyncadd [#allocation3], 0
      %s15 = sshll.u32 %s0, 4
      %s16 = int_to_ptr.hbm [resolvable:$true] %s15
      %s17 = sshll.u32 [#allocation2], 4
      %s18 = int_to_ptr.vmem [resolvable:$true] %s17
      %20 = dma.hbm_to_vmem [thread:$0]  %s16, 32, %s18, [#allocation3]
    $region5: #{tpu_custom_call.1} parent=1 // pred_fallthru
      _
    // Predicated region
    $region6: #{tpu_custom_call.1} parent=1 // pred_check
      _
    $region7: #{tpu_custom_call.1} parent=1 // pred_check_branch
      %22 = sbr.rel (0) target = $region9
    $region8: #{tpu_custom_call.1} parent=1 // pred_region
      %24 = vsyncadd [#allocation6], 0
      %s25 = sshll.u32 %s1, 4
      %s26 = int_to_ptr.hbm [resolvable:$true] %s25
      %s27 = sshll.u32 [#allocation5], 4
      %s28 = int_to_ptr.vmem [resolvable:$true] %s27
      %33 = dma.hbm_to_vmem [thread:$0]  %s26, 64, %s28, [#allocation6], 32, 32, 2
    $region9: #{tpu_custom_call.1} parent=1 // pred_fallthru
      _
    // Predicated region
    $region10: #{tpu_custom_call.1} parent=1 // pred_check
      _
    $region11: #{tpu_custom_call.1} parent=1 // pred_check_branch
      %35 = sbr.rel (0) target = $region13
    $region12: #{tpu_custom_call.1} parent=1 // pred_region
      %37 = dma.done [#allocation3], 32
    $region13: #{tpu_custom_call.1} parent=1 // pred_fallthru
      _
    // Predicated region
    $region14: #{tpu_custom_call.1} parent=1 // pred_check
      _
    $region15: #{tpu_custom_call.1} parent=1 // pred_check_branch
      %39 = sbr.rel (0) target = $region17
    $region16: #{tpu_custom_call.1} parent=1 // pred_region
      %41 = dma.done [#allocation6], 64
    $region17: #{tpu_custom_call.1} parent=1 // pred_fallthru
      _
    %v42 = vld [vmem:[#allocation2] sm:$0x3]
    %v43 = vld [vmem:[#allocation5] sm:$0x3]
    %v44 = vld [vmem:[#allocation5 + $0x2] sm:$0x3]
    %v46 = vrot.slane %v42, 1
    %v47 = vperm.slane %v42, 0
    %v48 = vperm.slane %v46, 0
    %v51 = vmul.f32 %v43, %v47
    %v52 = vmul.f32 %v44, %v48
    %53 = vst [vmem:[#allocation7] sm:$0x3] %v51
    %54 = vst [vmem:[#allocation7 + $0x2] sm:$0x3] %v52
    // Predicated region
    $region18: #{tpu_custom_call.1} parent=1 // pred_check
      _
    $region19: #{tpu_custom_call.1} parent=1 // pred_check_branch
      %56 = sbr.rel (0) target = $region21
    $region20: #{tpu_custom_call.1} parent=1 // pred_region
      %58 = vsyncadd [#allocation4], 0
      %s59 = sshll.u32 [#allocation7], 4
      %s60 = int_to_ptr.vmem [resolvable:$true] %s59
      %s61 = sshll.u32 %s2, 4
      %s62 = int_to_ptr.hbm [resolvable:$true] %s61
      %67 = dma.vmem_to_hbm [thread:$0]  %s60, 64, %s62, [#allocation4], 32, 32, 2
    $region21: #{tpu_custom_call.1} parent=1 // pred_fallthru
      _
    // Predicated region
    $region22: #{tpu_custom_call.1} parent=1 // pred_check
      _
    $region23: #{tpu_custom_call.1} parent=1 // pred_check_branch
      %69 = sbr.rel (0) target = $region25
    $region24: #{tpu_custom_call.1} parent=1 // pred_region
      %71 = dma.done [#allocation4], 64
    $region25: #{tpu_custom_call.1} parent=1 // pred_fallthru
      _
    %72 = vsyncpa [#allocation3], 1
    %73 = vsyncpa [#allocation6], 1
    %74 = vsyncpa [#allocation4], 1

</llo_original>
